<compile_context>
chip_gen: v5e
topology: v5e:2x2
jax: 0.10.0
libtpu: 0.0.40
codegen_flags: <defaults>
</compile_context>

<pallas_src>
import functools

import jax
import jax.numpy as jnp
from jax.experimental import pallas as pl
from jax.experimental.pallas import tpu as pltpu

LANES = 128
MAX_TILE_ROWS = 2048  # 2048 x 128 f32 = 1 MiB per input tile


def _kl_kernel(mean_ref, logvar_ref, out_ref, acc_ref, *, tile_rows,
               valid_rows, needs_mask):
    step = pl.program_id(0)

    @pl.when(step == 0)
    def _():
        acc_ref[...] = jnp.zeros_like(acc_ref)

    m = mean_ref[...].astype(jnp.float32)
    lv = logvar_ref[...].astype(jnp.float32)
    term = 1.0 + lv - m * m - jnp.exp(lv)

    if needs_mask:
        # Mask garbage rows of the final partial tile (beyond the real array).
        row_ids = step * tile_rows + jax.lax.broadcasted_iota(
            jnp.int32, term.shape, 0)
        term = jnp.where(row_ids < valid_rows, term, 0.0)

    # vreg-aligned fold: (tile_rows, 128) -> (tile_rows//8, 8, 128), summed
    # over the leading axis into one (8, 128) vreg.  Pure VPU adds per step.
    acc_ref[...] += term.reshape(tile_rows // 8, 8, LANES).sum(axis=0)

    @pl.when(step == pl.num_programs(0) - 1)
    def _():
        # Single cross-lane/sublane reduce + scale, done once.
        out_ref[...] = -0.5 * jnp.sum(acc_ref[...], keepdims=True)


def kl_divergence_loss(mean, logvar):
    assert mean.shape == logvar.shape
    n = mean.size
    if n == 0:
        return jnp.float32(0.0)

    m_flat = mean.reshape(-1)     # native dtype; reshape is free
    lv_flat = logvar.reshape(-1)

    lane_pad = (-n) % LANES
    rows = (n + lane_pad) // LANES

    if rows > MAX_TILE_ROWS:
        tile_rows = MAX_TILE_ROWS     # multiple of 16: safe for f32 and bf16
        row_pad = 0
    else:
        # Single-tile (small input) case: round rows up to a multiple of 8 so
        # the vreg-aligned fold in the kernel is valid.  Pad cost negligible.
        row_pad = (-rows) % 8
        tile_rows = rows + row_pad

    total_pad = lane_pad + row_pad * LANES
    if total_pad:
        # Rare / small-input path only; zero pad elements contribute exactly 0.
        m_flat = jnp.pad(m_flat, (0, total_pad))
        lv_flat = jnp.pad(lv_flat, (0, total_pad))

    valid_rows = rows + row_pad
    m2d = m_flat.reshape(valid_rows, LANES)
    lv2d = lv_flat.reshape(valid_rows, LANES)

    num_blocks = pl.cdiv(valid_rows, tile_rows)
    needs_mask = (num_blocks * tile_rows != valid_rows)

    kernel = functools.partial(
        _kl_kernel,
        tile_rows=tile_rows,
        valid_rows=valid_rows,
        needs_mask=needs_mask,
    )

    out = pl.pallas_call(
        kernel,
        out_shape=jax.ShapeDtypeStruct((1, 1), jnp.float32),
        grid_spec=pltpu.PrefetchScalarGridSpec(
            num_scalar_prefetch=0,
            grid=(num_blocks,),
            in_specs=[
                pl.BlockSpec((tile_rows, LANES), lambda i: (i, 0)),
                pl.BlockSpec((tile_rows, LANES), lambda i: (i, 0)),
            ],
            out_specs=pl.BlockSpec((1, 1), lambda i: (0, 0)),
            scratch_shapes=[pltpu.VMEM((8, LANES), jnp.float32)],
        ),
        compiler_params=pltpu.CompilerParams(
            # Single sequential reduction axis.
            # TODO(synk): on v7x (2 TCs) a leading "parallel" axis splitting the
            # row range in half (two partial outputs summed in the wrapper)
            # would roughly double effective HBM read bandwidth.
            dimension_semantics=("arbitrary",),
        ),
    )(m2d, lv2d)

    return out[0, 0]


def kl_divergence_loss_ref(mean, logvar):
    m = mean.astype(jnp.float32)
    lv = logvar.astype(jnp.float32)
    return -0.5 * jnp.sum(1.0 + lv - m * m - jnp.exp(lv))


if __name__ == "__main__":
    key = jax.random.PRNGKey(0)
    k1, k2, k3, k4, k5, k6 = jax.random.split(key, 6)

    # Primary case: VAE-style latent head (batch=2, channels=4, spatial=16).
    mean = jax.random.normal(k1, (2, 4, 16, 16), dtype=jnp.float32)
    logvar = jax.random.normal(k2, (2, 4, 16, 16), dtype=jnp.float32) * 0.5
    out = jax.block_until_ready(kl_divergence_loss(mean, logvar))
    ref = jax.block_until_ready(kl_divergence_loss_ref(mean, logvar))
    assert jnp.allclose(out, ref, rtol=1e-5, atol=1e-4), (out, ref)

    # Multi-tile grid with a masked partial last tile (rows > MAX_TILE_ROWS).
    mean2 = jax.random.normal(k3, (4, 64, 40, 40), dtype=jnp.float32)
    logvar2 = jax.random.normal(k4, (4, 64, 40, 40), dtype=jnp.float32) * 0.5
    out2 = jax.block_until_ready(kl_divergence_loss(mean2, logvar2))
    ref2 = jax.block_until_ready(kl_divergence_loss_ref(mean2, logvar2))
    assert jnp.allclose(out2, ref2, rtol=1e-4, atol=1e-2), (out2, ref2)

    # Odd element count (lane + row padding path) with native bf16 streaming.
    mean3 = (jax.random.normal(k5, (3, 5, 17, 13), dtype=jnp.float32)
             ).astype(jnp.bfloat16)
    logvar3 = (jax.random.normal(k6, (3, 5, 17, 13), dtype=jnp.float32) * 0.5
               ).astype(jnp.bfloat16)
    out3 = jax.block_until_ready(kl_divergence_loss(mean3, logvar3))
    ref3 = jax.block_until_ready(kl_divergence_loss_ref(mean3, logvar3))
    assert jnp.allclose(out3, ref3, rtol=1e-2, atol=1e-1), (out3, ref3)

    print("KERNEL_OK")
</pallas_src>

<mosaic_0001>
module attributes {stable_mosaic.version = 11 : i64} {
  func.func @_kl_kernel(%arg0: i32, %arg1: memref<16x128xf32, #tpu.memory_space<vmem>>, %arg2: memref<16x128xf32, #tpu.memory_space<vmem>>, %arg3: memref<1x1xf32, #tpu.memory_space<vmem>>, %arg4: memref<8x128xf32, #tpu.memory_space<vmem>>) attributes {dimension_semantics = [#tpu.dimension_semantics<arbitrary>], iteration_bounds = array<i64: 1>, scalar_prefetch = 0 : i64, scratch_operands = 1 : i64, tpu.core_type = #tpu.core_type<tc>, window_params = [{transform_indices = @transform_0, window_bounds = array<i64: 16, 128>}, {transform_indices = @transform_1, window_bounds = array<i64: 16, 128>}, {pipeline_mode = #tpu.pipeline_mode<synchronous>, transform_indices = @transform_2, window_bounds = array<i64: 1, 1>}]} {
    %c0_i32 = arith.constant 0 : i32
    %0 = arith.cmpi eq, %arg0, %c0_i32 : i32
    %1 = arith.extui %0 : i1 to i32
    %c0_i32_0 = arith.constant 0 : i32
    %2 = arith.cmpi ne, %1, %c0_i32_0 : i32
    scf.if %2 {
      %cst_11 = arith.constant 0.000000e+00 : f32
      %19 = vector.broadcast %cst_11 : f32 to vector<8x128xf32>
      %c0_12 = arith.constant 0 : index
      %c0_13 = arith.constant 0 : index
      %20 = vector.load %arg4[%c0_12, %c0_13] : memref<8x128xf32, #tpu.memory_space<vmem>>, vector<8x128xf32>
      tpu.vector_store %arg4[%c0_12, %c0_13], %19 {strides = array<i32>} : memref<8x128xf32, #tpu.memory_space<vmem>>, vector<8x128xf32>,
    } else {
    }
    %c0 = arith.constant 0 : index
    %c0_1 = arith.constant 0 : index
    %3 = vector.load %arg1[%c0, %c0_1] : memref<16x128xf32, #tpu.memory_space<vmem>>, vector<16x128xf32>
    %c0_2 = arith.constant 0 : index
    %c0_3 = arith.constant 0 : index
    %4 = vector.load %arg2[%c0_2, %c0_3] : memref<16x128xf32, #tpu.memory_space<vmem>>, vector<16x128xf32>
    %cst = arith.constant 1.000000e+00 : f32
    %5 = vector.broadcast %cst : f32 to vector<16x128xf32>
    %6 = arith.addf %5, %4 : vector<16x128xf32>
    %7 = arith.mulf %3, %3 : vector<16x128xf32>
    %8 = arith.subf %6, %7 : vector<16x128xf32>
    %9 = math.exp %4 : vector<16x128xf32>
    %10 = arith.subf %8, %9 : vector<16x128xf32>
    %c0_4 = arith.constant 0 : index
    %c0_5 = arith.constant 0 : index
    %11 = vector.load %arg4[%c0_4, %c0_5] : memref<8x128xf32, #tpu.memory_space<vmem>>, vector<8x128xf32>
    %12 = vector.shape_cast %10 : vector<16x128xf32> to vector<2x8x128xf32>
    %cst_6 = arith.constant dense<0.000000e+00> : vector<8x128xf32>
    %13 = vector.multi_reduction <add>, %12, %cst_6 [0] : vector<2x8x128xf32> to vector<8x128xf32>
    %14 = arith.addf %11, %13 : vector<8x128xf32>
    %c0_7 = arith.constant 0 : index
    %c0_8 = arith.constant 0 : index
    %15 = vector.load %arg4[%c0_7, %c0_8] : memref<8x128xf32, #tpu.memory_space<vmem>>, vector<8x128xf32>
    tpu.vector_store %arg4[%c0_7, %c0_8], %14 {strides = array<i32>} : memref<8x128xf32, #tpu.memory_space<vmem>>, vector<8x128xf32>,
    %c0_i32_9 = arith.constant 0 : i32
    %16 = arith.cmpi eq, %arg0, %c0_i32_9 : i32
    %17 = arith.extui %16 : i1 to i32
    %c0_i32_10 = arith.constant 0 : i32
    %18 = arith.cmpi ne, %17, %c0_i32_10 : i32
    scf.if %18 {
      %c0_11 = arith.constant 0 : index
      %c0_12 = arith.constant 0 : index
      %19 = vector.load %arg4[%c0_11, %c0_12] : memref<8x128xf32, #tpu.memory_space<vmem>>, vector<8x128xf32>
      %20 = vector.shape_cast %19 : vector<8x128xf32> to vector<1x8x128xf32>
      %cst_13 = arith.constant dense<0.000000e+00> : vector<1xf32>
      %21 = vector.multi_reduction <add>, %20, %cst_13 [1, 2] : vector<1x8x128xf32> to vector<1xf32>
      %22 = vector.shape_cast %21 : vector<1xf32> to vector<1x1x1xf32>
      %23 = vector.extract %22[0, 0, 0] : f32 from vector<1x1x1xf32>
      %24 = vector.broadcast %23 : f32 to vector<1x1xf32>
      %cst_14 = arith.constant -5.000000e-01 : f32
      %25 = vector.broadcast %cst_14 : f32 to vector<1x1xf32>
      %26 = arith.mulf %25, %24 : vector<1x1xf32>
      %c0_15 = arith.constant 0 : index
      %c0_16 = arith.constant 0 : index
      %27 = vector.load %arg3[%c0_15, %c0_16] : memref<1x1xf32, #tpu.memory_space<vmem>>, vector<1x1xf32>
      tpu.vector_store %arg3[%c0_15, %c0_16], %26 {strides = array<i32>} : memref<1x1xf32, #tpu.memory_space<vmem>>, vector<1x1xf32>,
    } else {
    }
    return
  }
  func.func @transform_0(%arg0: i32) -> (i32, i32) {
    %c0_i32 = arith.constant 0 : i32
    %c0_i32_0 = arith.constant 0 : i32
    return %arg0, %c0_i32 : i32, i32
  }
  func.func @transform_1(%arg0: i32) -> (i32, i32) {
    %c0_i32 = arith.constant 0 : i32
    %c0_i32_0 = arith.constant 0 : i32
    return %arg0, %c0_i32 : i32, i32
  }
  func.func @transform_2(%arg0: i32) -> (i32, i32) {
    %c0_i32 = arith.constant 0 : i32
    %c0_i32_0 = arith.constant 0 : i32
    %c0_i32_1 = arith.constant 0 : i32
    return %c0_i32, %c0_i32_0 : i32, i32
  }
}

</mosaic_0001>

<llo_original>
// kernel: tpu_custom_call.1
$region0: #{tpu_custom_call.1}
  #allocation0 [shape = 'u32[]', space=smem, size = 0x4, offset = 0x4, fixed_abs, tag = 'smem constant byte address 0x4 - core index']
  #allocation1 [shape = 'u32[72,128]{1,0:T(1,128)}', space=vmem, size = 0x9000, scoped, tag = 'internal scratch']
  #allocation2 [shape = 'f32[8,128]{1,0:T(8,128)}', space=vmem, size = 0x1000, scoped, tag = 'scratch operand']
  %s0 = inlined_call_operand.hbm [shape: f32[16,128], index: 0, kind: input, shape index: {}]
  %s1 = inlined_call_operand.hbm [shape: f32[16,128], index: 1, kind: input, shape index: {}]
  %s2 = inlined_call_operand.hbm [shape: f32[1,1], index: 2, kind: output, shape index: {}]
  %s3 = sld [smem:[#allocation0]]
  $region34: #{tpu_custom_call.1} parent=0
    _
  %s5 = ssub.s32 1, %s3
  %s6 = scalar_select 0, %s5, %s3
  $region1: #{tpu_custom_call.1} parent=0
    #allocation3 [shape = 'u8[8192]{0}', space=vmem, size = 0x2000, scoped, tag = 'input window, operand 0, single buffered']
    #allocation4 [shape = 's32[1]{0}', space=sflag, size = 0x4, scoped, tag = 'scoped memory for tpu_custom_call.1']
    #allocation5 [shape = 's32[1]{0}', space=sflag, size = 0x4, scoped, tag = 'scoped memory for tpu_custom_call.1']
    #allocation6 [shape = 'u8[8192]{0}', space=vmem, size = 0x2000, scoped, tag = 'input window, operand 1, single buffered']
    #allocation7 [shape = 's32[1]{0}', space=sflag, size = 0x4, scoped, tag = 'scoped memory for tpu_custom_call.1']
    #allocation8 [shape = 'u8[512]{0}', space=vmem, size = 0x400, scoped, tag = 'output window, operand 0, single buffered']
    %7 = vsyncpa [#allocation4], 0
    %8 = vsyncpa [#allocation7], 0
    %9 = vsyncpa [#allocation5], 0
    // Predicated region
    $region2: #{tpu_custom_call.1} parent=1 // pred_check
      _
    $region3: #{tpu_custom_call.1} parent=1 // pred_check_branch
      %11 = sbr.rel (0) target = $region5
    $region4: #{tpu_custom_call.1} parent=1 // pred_region
      %13 = vsyncadd [#allocation4], 0
      %s14 = sshll.u32 %s0, 4
      %s15 = int_to_ptr.hbm [resolvable:$true] %s14
      %s16 = sshll.u32 [#allocation3], 4
      %s17 = int_to_ptr.vmem [resolvable:$true] %s16
      %22 = dma.hbm_to_vmem [thread:$0]  %s15, 256, %s17, [#allocation4], 128, 128, 8
    $region5: #{tpu_custom_call.1} parent=1 // pred_fallthru
      _
    // Predicated region
    $region6: #{tpu_custom_call.1} parent=1 // pred_check
      _
    $region7: #{tpu_custom_call.1} parent=1 // pred_check_branch
      %24 = sbr.rel (0) target = $region9
    $region8: #{tpu_custom_call.1} parent=1 // pred_region
      %26 = vsyncadd [#allocation7], 0
      %s27 = sshll.u32 %s1, 4
      %s28 = int_to_ptr.hbm [resolvable:$true] %s27
      %s29 = sshll.u32 [#allocation6], 4
      %s30 = int_to_ptr.vmem [resolvable:$true] %s29
      %35 = dma.hbm_to_vmem [thread:$0]  %s28, 256, %s30, [#allocation7], 128, 128, 8
    $region9: #{tpu_custom_call.1} parent=1 // pred_fallthru
      _
    // Predicated region
    $region10: #{tpu_custom_call.1} parent=1 // pred_check
      _
    $region11: #{tpu_custom_call.1} parent=1 // pred_check_branch
      %37 = sbr.rel (0) target = $region13
    $region12: #{tpu_custom_call.1} parent=1 // pred_region
      %39 = dma.done [#allocation4], 256
    $region13: #{tpu_custom_call.1} parent=1 // pred_fallthru
      _
    // Predicated region
    $region14: #{tpu_custom_call.1} parent=1 // pred_check
      _
    $region15: #{tpu_custom_call.1} parent=1 // pred_check_branch
      %41 = sbr.rel (0) target = $region17
    $region16: #{tpu_custom_call.1} parent=1 // pred_region
      %43 = dma.done [#allocation7], 256
    $region17: #{tpu_custom_call.1} parent=1 // pred_fallthru
      _
    %p44 = scmp.eq.s32.totalorder 0, 0
    // Predicated region
    $region18: #{tpu_custom_call.1} parent=1 // pred_check
      %p45 = pneg %p44
    $region19: #{tpu_custom_call.1} parent=1 // pred_check_branch
      %47 = sbr.rel (%p45) target = $region21
    $region20: #{tpu_custom_call.1} parent=1 // pred_region
      %48 = vst [vmem:[#allocation2] sm:$0xff] 0.0
    $region21: #{tpu_custom_call.1} parent=1 // pred_fallthru
      _
    %v49 = vld [vmem:[#allocation3] sm:$0xff]
    %v50 = vld [vmem:[#allocation3 + $0x8] sm:$0xff]
    %v51 = vld [vmem:[#allocation6] sm:$0xff]
    %v52 = vld [vmem:[#allocation6 + $0x8] sm:$0xff]
    %v53 = vadd.f32 %v51, 1.0
    %v54 = vadd.f32 %v52, 1.0
    %v55 = vmul.f32 %v49, %v49
    %v56 = vmul.f32 %v50, %v50
    %v57 = vsub.f32 %v53, %v55
    %v58 = vsub.f32 %v54, %v56
    %v59 = vmul.f32 %v51, 1.442695
    %v60 = vpow.pop %v59
    %v61 = vmul.f32 %v52, 1.442695
    %v62 = vpow.pop %v61
    %v63 = vsub.f32 %v57, %v60
    %v64 = vsub.f32 %v58, %v62
    %v65 = vld [vmem:[#allocation2] sm:$0xff]
    %v66 = vadd.f32 %v63, %v64
    %v67 = vadd.f32 %v65, %v66
    %68 = vst [vmem:[#allocation2] sm:$0xff] %v67
    // Predicated region
    $region22: #{tpu_custom_call.1} parent=1 // pred_check
      %p69 = pneg %p44
    $region23: #{tpu_custom_call.1} parent=1 // pred_check_branch
      %71 = sbr.rel (%p69) target = $region25
    $region24: #{tpu_custom_call.1} parent=1 // pred_region
      %v72 = vld [vmem:[#allocation2] sm:$0xff]
      %73 = vadd.xlane.f32.xlu0 %v72
      %v74 = vpop.xlane.xlu0 %73
      %v75 = vrot.slane %v74, 4
      %v76 = vadd.f32 %v74, %v75
      %v77 = vrot.slane %v76, 2
      %v78 = vadd.f32 %v76, %v77
      %v79 = vrot.slane %v78, 1
      %v80 = vadd.f32 %v78, %v79
      %s81 = vtos %v80
      %v82 = vstv %s81
      %v83 = vmul.f32 %v82, -0.5
      %vm84 = vcmask 0
      %85 = vst.msk [vmem:[#allocation8] sm:$0x1] %vm84, %v83
    $region25: #{tpu_custom_call.1} parent=1 // pred_fallthru
      _
    // Predicated region
    $region26: #{tpu_custom_call.1} parent=1 // pred_check
      _
    $region27: #{tpu_custom_call.1} parent=1 // pred_check_branch
      %87 = sbr.rel (0) target = $region29
    $region28: #{tpu_custom_call.1} parent=1 // pred_region
      %89 = vsyncadd [#allocation5], 0
      %s91 = sshll.u32 [#allocation8], 4
      %s92 = int_to_ptr.vmem [resolvable:$true] %s91
      %s93 = sshll.u32 %s2, 4
      %s94 = int_to_ptr.hbm [resolvable:$true] %s93
      %96 = dma.vmem_to_hbm [thread:$0]  %s92, 16, %s94, [#allocation5]
    $region29: #{tpu_custom_call.1} parent=1 // pred_fallthru
      _
    // Predicated region
    $region30: #{tpu_custom_call.1} parent=1 // pred_check
      _
    $region31: #{tpu_custom_call.1} parent=1 // pred_check_branch
      %98 = sbr.rel (0) target = $region33
    $region32: #{tpu_custom_call.1} parent=1 // pred_region
      %100 = dma.done [#allocation5], 16
    $region33: #{tpu_custom_call.1} parent=1 // pred_fallthru
      _
    %101 = vsyncpa [#allocation4], 1
    %102 = vsyncpa [#allocation7], 1
    %103 = vsyncpa [#allocation5], 1

</llo_original>
